<compile_context>
chip_gen: v7x
topology: tpu7x:2x2x1
jax: 0.10.0
libtpu: 0.0.40
codegen_flags: <defaults>
</compile_context>

<pallas_src>
import functools

import jax
import jax.numpy as jnp
import numpy as np
from jax.experimental import pallas as pl
from jax.experimental.pallas import tpu as pltpu


# ----------------------------------------------------------------------------
# Pallas kernel
# ----------------------------------------------------------------------------
def _make_tv_kernel(batch_size, H, W, tv_weight):
    count_h = float((H - 1) * W)
    count_w = float(H * (W - 1))
    scale = float(tv_weight) * 2.0 / float(batch_size)

    def kernel(x_ref, o_ref, acc_ref):
        # x_ref: (G, H, W) block of the flattened (B*C, H, W) input, VMEM
        # o_ref: (1, 1) scalar output, SMEM
        # acc_ref: (2,) running [h_tv, w_tv] partial sums, SMEM
        i = pl.program_id(0)

        @pl.when(i == 0)
        def _init():
            acc_ref[0] = jnp.float32(0.0)
            acc_ref[1] = jnp.float32(0.0)

        x = x_ref[...].astype(jnp.float32)          # (G, H, W)
        dh = x[:, 1:, :] - x[:, :-1, :]             # diff along H (sublanes)
        dw = x[:, :, 1:] - x[:, :, :-1]             # diff along W (lanes)
        acc_ref[0] = acc_ref[0] + jnp.sum(dh * dh)
        acc_ref[1] = acc_ref[1] + jnp.sum(dw * dw)

        @pl.when(i == pl.num_programs(0) - 1)
        def _finalize():
            o_ref[0, 0] = scale * (acc_ref[0] / count_h + acc_ref[1] / count_w)

    return kernel


# ----------------------------------------------------------------------------
# Wrapper
# ----------------------------------------------------------------------------
def _pick_group(n_images, H, W, budget_bytes=2 * 1024 * 1024):
    # Largest divisor of n_images whose (G, H, W) f32 block stays under the
    # budget (the pipeline double-buffers the input block; this leaves ample
    # headroom for v7x's 64 MiB VMEM as well as v5e/v6e's 128 MiB).
    max_g = max(1, budget_bytes // max(1, H * W * 4))
    g = 1
    for d in range(1, n_images + 1):
        if n_images % d == 0 and d <= max_g:
            g = d
    return g


@functools.partial(jax.jit, static_argnames=("tv_weight",))
def l_tv_loss(x, tv_weight=1.0):
    # x: (B, C, H, W) float32
    B, C, H, W = x.shape
    N = B * C
    x3 = x.reshape(N, H, W)                         # free, contiguous reshape

    G = _pick_group(N, H, W)
    grid = (N // G,)
    kernel = _make_tv_kernel(B, H, W, tv_weight)

    out = pl.pallas_call(
        kernel,
        out_shape=jax.ShapeDtypeStruct((1, 1), jnp.float32),
        grid=grid,
        # Block (G, H, W): last two dims equal the full array dims, so the
        # (8, 128) divisibility rule is satisfied for any H, W.
        in_specs=[pl.BlockSpec((G, H, W), lambda i: (i, 0, 0))],
        out_specs=pl.BlockSpec(memory_space=pltpu.MemorySpace.SMEM),
        scratch_shapes=[pltpu.SMEM((2,), jnp.float32)],
        compiler_params=pltpu.CompilerParams(
            dimension_semantics=("arbitrary",)),    # accumulator carries
    )(x3)
    return out[0, 0]


# ----------------------------------------------------------------------------
# Pure-JAX reference (numerical sanity check)
# ----------------------------------------------------------------------------
def reference_l_tv(x, tv_weight=1.0):
    B, C, H, W = x.shape
    count_h = (H - 1) * W
    count_w = H * (W - 1)
    h_tv = jnp.sum(jnp.square(x[:, :, 1:, :] - x[:, :, :-1, :]))
    w_tv = jnp.sum(jnp.square(x[:, :, :, 1:] - x[:, :, :, :-1]))
    return tv_weight * 2.0 * (h_tv / count_h + w_tv / count_w) / B


# ----------------------------------------------------------------------------
# Main
# ----------------------------------------------------------------------------
if __name__ == "__main__":
    key = jax.random.PRNGKey(0)
    B, C, H, W = 2, 4, 16, 16
    x = jax.random.uniform(key, (B, C, H, W), jnp.float32)

    loss = jax.block_until_ready(l_tv_loss(x))
    ref = jax.block_until_ready(reference_l_tv(x))

    np.testing.assert_allclose(np.asarray(loss), np.asarray(ref),
                               rtol=1e-5, atol=1e-6)
    print("KERNEL_OK")
</pallas_src>

<mosaic_0001>
module attributes {stable_mosaic.version = 11 : i64} {
  func.func @kernel(%arg0: i32, %arg1: memref<8x16x16xf32, #tpu.memory_space<vmem>>, %arg2: memref<1x1xf32, #tpu.memory_space<smem>>, %arg3: memref<2xf32, #tpu.memory_space<smem>>) attributes {dimension_semantics = [#tpu.dimension_semantics<arbitrary>], iteration_bounds = array<i64: 1>, scalar_prefetch = 0 : i64, scratch_operands = 1 : i64, tpu.core_type = #tpu.core_type<tc>, window_params = [{transform_indices = @transform_0, window_bounds = array<i64: 8, 16, 16>}, {transform_indices = @transform_1, window_bounds = array<i64: 1, 1>}]} {
    %c0_i32 = arith.constant 0 : i32
    %0 = arith.cmpi eq, %arg0, %c0_i32 : i32
    %1 = arith.extui %0 : i1 to i32
    %c0_i32_0 = arith.constant 0 : i32
    %2 = arith.cmpi ne, %1, %c0_i32_0 : i32
    scf.if %2 {
      %cst_9 = arith.constant 0.000000e+00 : f32
      %c0_10 = arith.constant 0 : index
      %29 = memref.load %arg3[%c0_10] : memref<2xf32, #tpu.memory_space<smem>>
      memref.store %cst_9, %arg3[%c0_10] : memref<2xf32, #tpu.memory_space<smem>>
      %cst_11 = arith.constant 0.000000e+00 : f32
      %c1_12 = arith.constant 1 : index
      %30 = memref.load %arg3[%c1_12] : memref<2xf32, #tpu.memory_space<smem>>
      memref.store %cst_11, %arg3[%c1_12] : memref<2xf32, #tpu.memory_space<smem>>
    } else {
    }
    %c0 = arith.constant 0 : index
    %c0_1 = arith.constant 0 : index
    %c0_2 = arith.constant 0 : index
    %3 = vector.load %arg1[%c0, %c0_1, %c0_2] : memref<8x16x16xf32, #tpu.memory_space<vmem>>, vector<8x16x16xf32>
    %4 = vector.extract_strided_slice %3 {offsets = [0, 1, 0], sizes = [8, 15, 16], strides = [1, 1, 1]} : vector<8x16x16xf32> to vector<8x15x16xf32>
    %5 = vector.extract_strided_slice %3 {offsets = [0, 0, 0], sizes = [8, 15, 16], strides = [1, 1, 1]} : vector<8x16x16xf32> to vector<8x15x16xf32>
    %6 = arith.subf %4, %5 : vector<8x15x16xf32>
    %7 = vector.extract_strided_slice %3 {offsets = [0, 0, 1], sizes = [8, 16, 15], strides = [1, 1, 1]} : vector<8x16x16xf32> to vector<8x16x15xf32>
    %8 = vector.extract_strided_slice %3 {offsets = [0, 0, 0], sizes = [8, 16, 15], strides = [1, 1, 1]} : vector<8x16x16xf32> to vector<8x16x15xf32>
    %9 = arith.subf %7, %8 : vector<8x16x15xf32>
    %c0_3 = arith.constant 0 : index
    %10 = memref.load %arg3[%c0_3] : memref<2xf32, #tpu.memory_space<smem>>
    %11 = arith.mulf %6, %6 : vector<8x15x16xf32>
    %12 = vector.shape_cast %11 : vector<8x15x16xf32> to vector<1x8x15x16xf32>
    %cst = arith.constant dense<0.000000e+00> : vector<1xf32>
    %13 = vector.multi_reduction <add>, %12, %cst [1, 2, 3] : vector<1x8x15x16xf32> to vector<1xf32>
    %14 = vector.shape_cast %13 : vector<1xf32> to vector<1x1x1x1xf32>
    %15 = vector.extract %14[0, 0, 0, 0] : f32 from vector<1x1x1x1xf32>
    %16 = arith.addf %10, %15 : f32
    %c0_4 = arith.constant 0 : index
    %17 = memref.load %arg3[%c0_4] : memref<2xf32, #tpu.memory_space<smem>>
    memref.store %16, %arg3[%c0_4] : memref<2xf32, #tpu.memory_space<smem>>
    %c1 = arith.constant 1 : index
    %18 = memref.load %arg3[%c1] : memref<2xf32, #tpu.memory_space<smem>>
    %19 = arith.mulf %9, %9 : vector<8x16x15xf32>
    %20 = vector.shape_cast %19 : vector<8x16x15xf32> to vector<1x8x16x15xf32>
    %cst_5 = arith.constant dense<0.000000e+00> : vector<1xf32>
    %21 = vector.multi_reduction <add>, %20, %cst_5 [1, 2, 3] : vector<1x8x16x15xf32> to vector<1xf32>
    %22 = vector.shape_cast %21 : vector<1xf32> to vector<1x1x1x1xf32>
    %23 = vector.extract %22[0, 0, 0, 0] : f32 from vector<1x1x1x1xf32>
    %24 = arith.addf %18, %23 : f32
    %c1_6 = arith.constant 1 : index
    %25 = memref.load %arg3[%c1_6] : memref<2xf32, #tpu.memory_space<smem>>
    memref.store %24, %arg3[%c1_6] : memref<2xf32, #tpu.memory_space<smem>>
    %c0_i32_7 = arith.constant 0 : i32
    %26 = arith.cmpi eq, %arg0, %c0_i32_7 : i32
    %27 = arith.extui %26 : i1 to i32
    %c0_i32_8 = arith.constant 0 : i32
    %28 = arith.cmpi ne, %27, %c0_i32_8 : i32
    scf.if %28 {
      %c0_9 = arith.constant 0 : index
      %29 = memref.load %arg3[%c0_9] : memref<2xf32, #tpu.memory_space<smem>>
      %cst_10 = arith.constant 2.400000e+02 : f32
      %30 = arith.divf %29, %cst_10 : f32
      %c1_11 = arith.constant 1 : index
      %31 = memref.load %arg3[%c1_11] : memref<2xf32, #tpu.memory_space<smem>>
      %cst_12 = arith.constant 2.400000e+02 : f32
      %32 = arith.divf %31, %cst_12 : f32
      %33 = arith.addf %30, %32 : f32
      %cst_13 = arith.constant 1.000000e+00 : f32
      %34 = arith.mulf %cst_13, %33 : f32
      %c0_14 = arith.constant 0 : index
      %c0_15 = arith.constant 0 : index
      %35 = memref.load %arg2[%c0_14, %c0_15] : memref<1x1xf32, #tpu.memory_space<smem>>
      memref.store %34, %arg2[%c0_14, %c0_15] : memref<1x1xf32, #tpu.memory_space<smem>>
    } else {
    }
    return
  }
  func.func @transform_0(%arg0: i32) -> (i32, i32, i32) {
    %c0_i32 = arith.constant 0 : i32
    %c0_i32_0 = arith.constant 0 : i32
    %c0_i32_1 = arith.constant 0 : i32
    return %arg0, %c0_i32, %c0_i32_0 : i32, i32, i32
  }
  func.func @transform_1(%arg0: i32) -> (i32, i32) {
    %c0_i32 = arith.constant 0 : i32
    %c0_i32_0 = arith.constant 0 : i32
    %c0_i32_1 = arith.constant 0 : i32
    return %c0_i32, %c0_i32_0 : i32, i32
  }
}

</mosaic_0001>

<llo_original>
// kernel: l_tv_loss.1
$region0: #{l_tv_loss.1}
  #allocation0 [shape = 'u32[]', space=smem, size = 0x4, offset = 0x4, fixed_abs, tag = 'smem constant byte address 0x4 - core index']
  #allocation1 [shape = 'u32[144,128]{1,0:T(1,128)}', space=vmem, size = 0x12000, scoped, tag = 'internal scratch']
  #allocation2 [shape = 'f32[2]{0:T(128)}', space=smem, size = 0x200, scoped, tag = 'scratch operand']
  %s0 = inlined_call_operand.hbm [shape: f32[8,16,16], index: 0, kind: input, shape index: {}]
  %s1 = inlined_call_operand.hbm [shape: f32[1,1], index: 1, kind: output, shape index: {}]
  %s2 = sld [smem:[#allocation0]]
  $region26: #{l_tv_loss.1} parent=0
    _
  %s4 = ssub.s32 1, %s2
  %s5 = scalar_select 0, %s4, %s2
  $region1: #{l_tv_loss.1} parent=0
    #allocation3 [shape = 'u8[65536]{0}', space=vmem, size = 0x10000, scoped, tag = 'input window, operand 0, single buffered']
    #allocation4 [shape = 's32[1]{0}', space=sflag, size = 0x4, scoped, tag = 'scoped memory for l_tv_loss.1']
    #allocation5 [shape = 's32[1]{0}', space=sflag, size = 0x4, scoped, tag = 'scoped memory for l_tv_loss.1']
    #allocation6 [shape = 'u8[512]{0}', space=smem, size = 0x200, scoped, tag = 'output window, operand 0, single buffered']
    %6 = vsyncpa [#allocation4], 0
    %7 = vsyncpa [#allocation5], 0
    // Predicated region
    $region2: #{l_tv_loss.1} parent=1 // pred_check
      _
    $region3: #{l_tv_loss.1} parent=1 // pred_check_branch
      %9 = sbr.rel (0) target = $region5
    $region4: #{l_tv_loss.1} parent=1 // pred_region
      %s11 = ssub.s32 2048, 2048
      %12 = vsyncadd [#allocation4], %s11
      %s13 = sshll.u32 [#allocation3], 4
      %s14 = int_to_ptr.vmem [resolvable:$true] %s13
      %19 = dma.hbm_to_vmem [thread:$0]  %s0, 2048, %s14, [#allocation4], 128, 128, 8
    $region5: #{l_tv_loss.1} parent=1 // pred_fallthru
      _
    // Predicated region
    $region6: #{l_tv_loss.1} parent=1 // pred_check
      _
    $region7: #{l_tv_loss.1} parent=1 // pred_check_branch
      %21 = sbr.rel (0) target = $region9
    $region8: #{l_tv_loss.1} parent=1 // pred_region
      %22 = dma.done [#allocation4], 2048
    $region9: #{l_tv_loss.1} parent=1 // pred_fallthru
      _
    %p23 = scmp.eq.s32.totalorder 0, 0
    // Predicated region
    $region10: #{l_tv_loss.1} parent=1 // pred_check
      %p24 = pneg %p23
    $region11: #{l_tv_loss.1} parent=1 // pred_check_branch
      %26 = sbr.rel (%p24) target = $region13
    $region12: #{l_tv_loss.1} parent=1 // pred_region
      %s27 = scalar_lea.smem [#allocation2], 0
      %28 = sst [smem:[%s27]] 0.0
      %s29 = scalar_lea.smem [#allocation2], 1
      %30 = sst [smem:[%s29]] 0.0
    $region13: #{l_tv_loss.1} parent=1 // pred_fallthru
      _
    %v31 = vld [vmem:[#allocation3] sm:$0xff]
    %v32 = vld [vmem:[#allocation3 + $0x8] sm:$0xff]
    %v33 = vld [vmem:[#allocation3 + $0x10] sm:$0xff]
    %v34 = vld [vmem:[#allocation3 + $0x18] sm:$0xff]
    %v35 = vld [vmem:[#allocation3 + $0x20] sm:$0xff]
    %v36 = vld [vmem:[#allocation3 + $0x28] sm:$0xff]
    %v37 = vld [vmem:[#allocation3 + $0x30] sm:$0xff]
    %v38 = vld [vmem:[#allocation3 + $0x38] sm:$0xff]
    %v39 = vld [vmem:[#allocation3 + $0x40] sm:$0xff]
    %v40 = vld [vmem:[#allocation3 + $0x48] sm:$0xff]
    %v41 = vld [vmem:[#allocation3 + $0x50] sm:$0xff]
    %v42 = vld [vmem:[#allocation3 + $0x58] sm:$0xff]
    %v43 = vld [vmem:[#allocation3 + $0x60] sm:$0xff]
    %v44 = vld [vmem:[#allocation3 + $0x68] sm:$0xff]
    %v45 = vld [vmem:[#allocation3 + $0x70] sm:$0xff]
    %v46 = vld [vmem:[#allocation3 + $0x78] sm:$0xff]
    %vm63 = vcmask 1040384
    %v64 = vrot.slane %v31, 7
    %v65 = vrot.slane %v32, 7
    %v66 = vsel %vm63, %v64, %v65
    %v67 = vrot.slane %v33, 7
    %v68 = vrot.slane %v34, 7
    %v69 = vsel %vm63, %v67, %v68
    %v70 = vrot.slane %v35, 7
    %v71 = vrot.slane %v36, 7
    %v72 = vsel %vm63, %v70, %v71
    %v73 = vrot.slane %v37, 7
    %v74 = vrot.slane %v38, 7
    %v75 = vsel %vm63, %v73, %v74
    %v76 = vrot.slane %v39, 7
    %v77 = vrot.slane %v40, 7
    %v78 = vsel %vm63, %v76, %v77
    %v79 = vrot.slane %v41, 7
    %v80 = vrot.slane %v42, 7
    %v81 = vsel %vm63, %v79, %v80
    %v82 = vrot.slane %v43, 7
    %v83 = vrot.slane %v44, 7
    %v84 = vsel %vm63, %v82, %v83
    %v85 = vrot.slane %v45, 7
    %v86 = vrot.slane %v46, 7
    %v87 = vsel %vm63, %v85, %v86
    %v104 = vsub.f32 %v31, %v64
    %v105 = vsub.f32 %v32, %v66
    %v106 = vsub.f32 %v33, %v67
    %v107 = vsub.f32 %v34, %v69
    %v108 = vsub.f32 %v35, %v70
    %v109 = vsub.f32 %v36, %v72
    %v110 = vsub.f32 %v37, %v73
    %v111 = vsub.f32 %v38, %v75
    %v112 = vsub.f32 %v39, %v76
    %v113 = vsub.f32 %v40, %v78
    %v114 = vsub.f32 %v41, %v79
    %v115 = vsub.f32 %v42, %v81
    %v116 = vsub.f32 %v43, %v82
    %v117 = vsub.f32 %v44, %v84
    %v118 = vsub.f32 %v45, %v85
    %v119 = vsub.f32 %v46, %v87
    %120 = vrot.lane.b32.xlu0 %v31, 1
    %v121 = vpop.permute.xlu0 %120
    %122 = vrot.lane.b32.xlu0 %v32, 1
    %v123 = vpop.permute.xlu0 %122
    %124 = vrot.lane.b32.xlu0 %v33, 1
    %v125 = vpop.permute.xlu0 %124
    %126 = vrot.lane.b32.xlu0 %v34, 1
    %v127 = vpop.permute.xlu0 %126
    %128 = vrot.lane.b32.xlu0 %v35, 1
    %v129 = vpop.permute.xlu0 %128
    %130 = vrot.lane.b32.xlu0 %v36, 1
    %v131 = vpop.permute.xlu0 %130
    %132 = vrot.lane.b32.xlu0 %v37, 1
    %v133 = vpop.permute.xlu0 %132
    %134 = vrot.lane.b32.xlu0 %v38, 1
    %v135 = vpop.permute.xlu0 %134
    %136 = vrot.lane.b32.xlu0 %v39, 1
    %v137 = vpop.permute.xlu0 %136
    %138 = vrot.lane.b32.xlu0 %v40, 1
    %v139 = vpop.permute.xlu0 %138
    %140 = vrot.lane.b32.xlu0 %v41, 1
    %v141 = vpop.permute.xlu0 %140
    %142 = vrot.lane.b32.xlu0 %v42, 1
    %v143 = vpop.permute.xlu0 %142
    %144 = vrot.lane.b32.xlu0 %v43, 1
    %v145 = vpop.permute.xlu0 %144
    %146 = vrot.lane.b32.xlu0 %v44, 1
    %v147 = vpop.permute.xlu0 %146
    %148 = vrot.lane.b32.xlu0 %v45, 1
    %v149 = vpop.permute.xlu0 %148
    %150 = vrot.lane.b32.xlu0 %v46, 1
    %v151 = vpop.permute.xlu0 %150
    %v168 = vsub.f32 %v31, %v121
    %v169 = vsub.f32 %v32, %v123
    %v170 = vsub.f32 %v33, %v125
    %v171 = vsub.f32 %v34, %v127
    %v172 = vsub.f32 %v35, %v129
    %v173 = vsub.f32 %v36, %v131
    %v174 = vsub.f32 %v37, %v133
    %v175 = vsub.f32 %v38, %v135
    %v176 = vsub.f32 %v39, %v137
    %v177 = vsub.f32 %v40, %v139
    %v178 = vsub.f32 %v41, %v141
    %v179 = vsub.f32 %v42, %v143
    %v180 = vsub.f32 %v43, %v145
    %v181 = vsub.f32 %v44, %v147
    %v182 = vsub.f32 %v45, %v149
    %v183 = vsub.f32 %v46, %v151
    %s184 = sld [smem:[#allocation2]]
    %v185 = vmul.f32 %v104, %v104
    %v186 = vmul.f32 %v105, %v105
    %v187 = vmul.f32 %v106, %v106
    %v188 = vmul.f32 %v107, %v107
    %v189 = vmul.f32 %v108, %v108
    %v190 = vmul.f32 %v109, %v109
    %v191 = vmul.f32 %v110, %v110
    %v192 = vmul.f32 %v111, %v111
    %v193 = vmul.f32 %v112, %v112
    %v194 = vmul.f32 %v113, %v113
    %v195 = vmul.f32 %v114, %v114
    %v196 = vmul.f32 %v115, %v115
    %v197 = vmul.f32 %v116, %v116
    %v198 = vmul.f32 %v117, %v117
    %v199 = vmul.f32 %v118, %v118
    %v200 = vmul.f32 %v119, %v119
    %vm217 = vcmask 1046528
    %v218 = vrot.slane %v185, 1
    %v219 = vrot.slane %v186, 1
    %v220 = vsel %vm217, %v218, %v219
    %v221 = vrot.slane %v187, 1
    %v222 = vrot.slane %v188, 1
    %v223 = vsel %vm217, %v221, %v222
    %v224 = vrot.slane %v189, 1
    %v225 = vrot.slane %v190, 1
    %v226 = vsel %vm217, %v224, %v225
    %v227 = vrot.slane %v191, 1
    %v228 = vrot.slane %v192, 1
    %v229 = vsel %vm217, %v227, %v228
    %v230 = vrot.slane %v193, 1
    %v231 = vrot.slane %v194, 1
    %v232 = vsel %vm217, %v230, %v231
    %v233 = vrot.slane %v195, 1
    %v234 = vrot.slane %v196, 1
    %v235 = vsel %vm217, %v233, %v234
    %v236 = vrot.slane %v197, 1
    %v237 = vrot.slane %v198, 1
    %v238 = vsel %vm217, %v236, %v237
    %v239 = vrot.slane %v199, 1
    %v240 = vrot.slane %v200, 1
    %v241 = vsel %vm217, %v239, %v240
    %vm258 = vcmask 130048
    %v259 = vsel %vm258, %v220, 0.0
    %vm260 = vcmask 129024
    %v261 = vsel %vm260, %v219, 0.0
    %v262 = vadd.f32 %v259, %v261
    %v263 = vsel %vm258, %v223, 0.0
    %v264 = vadd.f32 %v262, %v263
    %v265 = vsel %vm260, %v222, 0.0
    %v266 = vadd.f32 %v264, %v265
    %v267 = vsel %vm258, %v226, 0.0
    %v268 = vadd.f32 %v266, %v267
    %v269 = vsel %vm260, %v225, 0.0
    %v270 = vadd.f32 %v268, %v269
    %v271 = vsel %vm258, %v229, 0.0
    %v272 = vadd.f32 %v270, %v271
    %v273 = vsel %vm260, %v228, 0.0
    %v274 = vadd.f32 %v272, %v273
    %v275 = vsel %vm258, %v232, 0.0
    %v276 = vadd.f32 %v274, %v275
    %v277 = vsel %vm260, %v231, 0.0
    %v278 = vadd.f32 %v276, %v277
    %v279 = vsel %vm258, %v235, 0.0
    %v280 = vadd.f32 %v278, %v279
    %v281 = vsel %vm260, %v234, 0.0
    %v282 = vadd.f32 %v280, %v281
    %v283 = vsel %vm258, %v238, 0.0
    %v284 = vadd.f32 %v282, %v283
    %v285 = vsel %vm260, %v237, 0.0
    %v286 = vadd.f32 %v284, %v285
    %v287 = vsel %vm258, %v241, 0.0
    %v288 = vadd.f32 %v286, %v287
    %v289 = vsel %vm260, %v240, 0.0
    %v290 = vadd.f32 %v288, %v289
    %291 = vadd.xlane.f32.xlu0 %v290
    %v292 = vpop.xlane.xlu0 %291
    %v293 = vrot.slane %v292, 4
    %v294 = vadd.f32 %v292, %v293
    %v295 = vrot.slane %v294, 2
    %v296 = vadd.f32 %v294, %v295
    %v297 = vrot.slane %v296, 1
    %v298 = vadd.f32 %v296, %v297
    %s299 = vtos %v298
    %s300 = sadd.f32 %s184, %s299
    %s301 = scalar_lea.smem [#allocation2], 0
    %302 = sst [smem:[%s301]] %s300
    %s303 = sld [smem:[#allocation2 + $0x1]]
    %v304 = vmul.f32 %v168, %v168
    %v305 = vmul.f32 %v169, %v169
    %v306 = vmul.f32 %v170, %v170
    %v307 = vmul.f32 %v171, %v171
    %v308 = vmul.f32 %v172, %v172
    %v309 = vmul.f32 %v173, %v173
    %v310 = vmul.f32 %v174, %v174
    %v311 = vmul.f32 %v175, %v175
    %v312 = vmul.f32 %v176, %v176
    %v313 = vmul.f32 %v177, %v177
    %v314 = vmul.f32 %v178, %v178
    %v315 = vmul.f32 %v179, %v179
    %v316 = vmul.f32 %v180, %v180
    %v317 = vmul.f32 %v181, %v181
    %v318 = vmul.f32 %v182, %v182
    %v319 = vmul.f32 %v183, %v183
    %336 = vrot.lane.b32.xlu0 %v304, 127
    %v337 = vpop.permute.xlu0 %336
    %338 = vrot.lane.b32.xlu0 %v305, 127
    %v339 = vpop.permute.xlu0 %338
    %340 = vrot.lane.b32.xlu0 %v306, 127
    %v341 = vpop.permute.xlu0 %340
    %342 = vrot.lane.b32.xlu0 %v307, 127
    %v343 = vpop.permute.xlu0 %342
    %344 = vrot.lane.b32.xlu0 %v308, 127
    %v345 = vpop.permute.xlu0 %344
    %346 = vrot.lane.b32.xlu0 %v309, 127
    %v347 = vpop.permute.xlu0 %346
    %348 = vrot.lane.b32.xlu0 %v310, 127
    %v349 = vpop.permute.xlu0 %348
    %350 = vrot.lane.b32.xlu0 %v311, 127
    %v351 = vpop.permute.xlu0 %350
    %352 = vrot.lane.b32.xlu0 %v312, 127
    %v353 = vpop.permute.xlu0 %352
    %354 = vrot.lane.b32.xlu0 %v313, 127
    %v355 = vpop.permute.xlu0 %354
    %356 = vrot.lane.b32.xlu0 %v314, 127
    %v357 = vpop.permute.xlu0 %356
    %358 = vrot.lane.b32.xlu0 %v315, 127
    %v359 = vpop.permute.xlu0 %358
    %360 = vrot.lane.b32.xlu0 %v316, 127
    %v361 = vpop.permute.xlu0 %360
    %362 = vrot.lane.b32.xlu0 %v317, 127
    %v363 = vpop.permute.xlu0 %362
    %364 = vrot.lane.b32.xlu0 %v318, 127
    %v365 = vpop.permute.xlu0 %364
    %366 = vrot.lane.b32.xlu0 %v319, 127
    %v367 = vpop.permute.xlu0 %366
    %vm384 = vcmask 121856
    %v385 = vsel %vm384, %v337, 0.0
    %v386 = vsel %vm384, %v339, 0.0
    %v387 = vadd.f32 %v385, %v386
    %v388 = vsel %vm384, %v341, 0.0
    %v389 = vadd.f32 %v387, %v388
    %v390 = vsel %vm384, %v343, 0.0
    %v391 = vadd.f32 %v389, %v390
    %v392 = vsel %vm384, %v345, 0.0
    %v393 = vadd.f32 %v391, %v392
    %v394 = vsel %vm384, %v347, 0.0
    %v395 = vadd.f32 %v393, %v394
    %v396 = vsel %vm384, %v349, 0.0
    %v397 = vadd.f32 %v395, %v396
    %v398 = vsel %vm384, %v351, 0.0
    %v399 = vadd.f32 %v397, %v398
    %v400 = vsel %vm384, %v353, 0.0
    %v401 = vadd.f32 %v399, %v400
    %v402 = vsel %vm384, %v355, 0.0
    %v403 = vadd.f32 %v401, %v402
    %v404 = vsel %vm384, %v357, 0.0
    %v405 = vadd.f32 %v403, %v404
    %v406 = vsel %vm384, %v359, 0.0
    %v407 = vadd.f32 %v405, %v406
    %v408 = vsel %vm384, %v361, 0.0
    %v409 = vadd.f32 %v407, %v408
    %v410 = vsel %vm384, %v363, 0.0
    %v411 = vadd.f32 %v409, %v410
    %v412 = vsel %vm384, %v365, 0.0
    %v413 = vadd.f32 %v411, %v412
    %v414 = vsel %vm384, %v367, 0.0
    %v415 = vadd.f32 %v413, %v414
    %416 = vadd.xlane.f32.xlu0 %v415
    %v417 = vpop.xlane.xlu0 %416
    %v418 = vrot.slane %v417, 4
    %v419 = vadd.f32 %v417, %v418
    %v420 = vrot.slane %v419, 2
    %v421 = vadd.f32 %v419, %v420
    %v422 = vrot.slane %v421, 1
    %v423 = vadd.f32 %v421, %v422
    %s424 = vtos %v423
    %s425 = sadd.f32 %s303, %s424
    %s426 = scalar_lea.smem [#allocation2], 1
    %427 = sst [smem:[%s426]] %s425
    // Predicated region
    $region14: #{l_tv_loss.1} parent=1 // pred_check
      %p428 = pneg %p23
    $region15: #{l_tv_loss.1} parent=1 // pred_check_branch
      %430 = sbr.rel (%p428) target = $region17
    $region16: #{l_tv_loss.1} parent=1 // pred_region
      %s431 = sld [smem:[#allocation2]]
      %v432 = vrcp.pop 240.0
      %s433 = vtos %v432
      %s434 = smul.f32 %s431, %s433
      %s435 = sld [smem:[#allocation2 + $0x1]]
      %v436 = vrcp.pop 240.0
      %s437 = vtos %v436
      %s438 = smul.f32 %s435, %s437
      %s439 = sadd.f32 %s434, %s438
      %s440 = scalar_lea.smem [#allocation6], 0
      %441 = sst [smem:[%s440]] %s439
    $region17: #{l_tv_loss.1} parent=1 // pred_fallthru
      _
    // Predicated region
    $region18: #{l_tv_loss.1} parent=1 // pred_check
      _
    $region19: #{l_tv_loss.1} parent=1 // pred_check_branch
      %443 = sbr.rel (0) target = $region21
    $region20: #{l_tv_loss.1} parent=1 // pred_region
      %s445 = ssub.s32 16, 16
      %446 = vsyncadd [#allocation5], %s445
      %449 = dma.smem_to_hbm [#allocation6], 16, %s1, [#allocation5]
    $region21: #{l_tv_loss.1} parent=1 // pred_fallthru
      _
    // Predicated region
    $region22: #{l_tv_loss.1} parent=1 // pred_check
      _
    $region23: #{l_tv_loss.1} parent=1 // pred_check_branch
      %451 = sbr.rel (0) target = $region25
    $region24: #{l_tv_loss.1} parent=1 // pred_region
      %452 = dma.done [#allocation5], 16
    $region25: #{l_tv_loss.1} parent=1 // pred_fallthru
      _
    %453 = sfence
    %454 = vsyncpa [#allocation4], 1
    %455 = vsyncpa [#allocation5], 1

</llo_original>
